<compile_context>
chip_gen: v7x
topology: tpu7x:2x2x1
jax: 0.10.0
libtpu: 0.0.40
codegen_flags: <defaults>
</compile_context>

<pallas_src>
import jax
import jax.numpy as jnp
import numpy as np
from jax.experimental import pallas as pl
from jax.experimental.pallas import tpu as pltpu


def _round_up(a: int, b: int) -> int:
    return (a + b - 1) // b * b


def _downsample_mm_kernel(x_ref, w_ref, b_ref, o_ref):
    # x_ref: (1, TM, K)   im2col tile, compute dtype (bf16)
    # w_ref: (K, TN)      fused conv weight tile, compute dtype (bf16)
    # b_ref: (1, TN)      bias, f32
    # o_ref: (1, TM, TN)  output tile
    acc = jnp.dot(x_ref[0], w_ref[...], preferred_element_type=jnp.float32)  # (TM, TN) f32
    acc = acc + b_ref[...]                                                   # (1, TN) broadcast
    o_ref[...] = acc[None, :, :].astype(o_ref.dtype)


def downsample(x_nchw, weight_oihw, bias, *, compute_dtype=jnp.bfloat16):
    """Conv2d(dim, dim, kernel=3, stride=2, padding=1) — PyTorch semantics.

    Matmuls run in `compute_dtype` (bf16 by default, MXU-native) with f32 accumulation.
    """
    B, C, H, W = x_nchw.shape
    assert weight_oihw.shape == (C, C, 3, 3)
    Ho = (H - 1) // 2 + 1
    Wo = (W - 1) // 2 + 1
    M = Ho * Wo
    K = 9 * C
    out_dtype = x_nchw.dtype

    # ---------------- XLA-side layout plumbing (no compute) ----------------
    # NHWC, zero pad: top/left by 1, bottom/right just enough for the last tap.
    x = jnp.transpose(x_nchw, (0, 2, 3, 1)).astype(compute_dtype)            # (B, H, W, C)
    pad_b = 2 * Ho - H                                                       # 0 (even) or 1 (odd)
    pad_r = 2 * Wo - W
    xp = jnp.pad(x, ((0, 0), (1, pad_b), (1, pad_r), (0, 0)))                # (B, 2Ho+1, 2Wo+1, C)

    # Stride-2 im2col: 9 tap slabs, each (B, Ho, Wo, C), concatenated along K.
    taps = []
    for kh in range(3):
        for kw in range(3):
            taps.append(xp[:, kh:kh + 2 * Ho - 1:2, kw:kw + 2 * Wo - 1:2, :])
    col = jnp.stack(taps, axis=3).reshape(B, M, K)                           # (B, M, 9C)
    # TODO(synk): the im2col pre-pass adds ~2.25x input HBM traffic; a strided-DMA
    # in-kernel gather (memory_space=pl.ANY) would remove it.

    # Fused weight: OIHW -> (kh, kw, cin, cout) -> (9C, Cout); pad Cout to lane multiple.
    C_pad = _round_up(C, 128)
    TN = 256 if (C_pad % 256 == 0) else 128
    w2 = jnp.transpose(weight_oihw, (2, 3, 1, 0)).reshape(K, C)
    w2 = jnp.pad(w2, ((0, 0), (0, C_pad - C))).astype(compute_dtype)         # (9C, C_pad)
    b2 = jnp.pad(bias.astype(jnp.float32), (0, C_pad - C)).reshape(1, C_pad)

    # M (= flattened Ho*Wo) tile: up to 512 rows, bounded so the bf16 x-tile stays <~8 MiB.
    cbytes = jnp.dtype(compute_dtype).itemsize
    tm_budget = max(8, ((8 * 1024 * 1024) // (K * cbytes)) // 8 * 8)
    TM = int(min(512, tm_budget, _round_up(M, 8)))
    M_pad = _round_up(M, TM)
    col = jnp.pad(col, ((0, 0), (0, M_pad - M), (0, 0)))                     # (B, M_pad, 9C)

    grid = (B, C_pad // TN, M_pad // TM)                                     # cout slower than M

    tile_bytes = (TM * K + K * TN) * cbytes + TM * TN * jnp.dtype(out_dtype).itemsize + TN * 4
    vmem_limit = int(min(64 * 1024 * 1024, max(32 * 1024 * 1024, 3 * tile_bytes)))

    out = pl.pallas_call(
        _downsample_mm_kernel,
        out_shape=jax.ShapeDtypeStruct((B, M_pad, C_pad), out_dtype),
        grid_spec=pltpu.PrefetchScalarGridSpec(
            num_scalar_prefetch=0,
            grid=grid,
            in_specs=[
                pl.BlockSpec((1, TM, K), lambda b, n, m: (b, m, 0)),         # activations
                pl.BlockSpec((K, TN), lambda b, n, m: (0, n)),               # fused weight
                pl.BlockSpec((1, TN), lambda b, n, m: (0, n)),               # bias
            ],
            out_specs=pl.BlockSpec((1, TM, TN), lambda b, n, m: (b, m, n)),
        ),
        compiler_params=pltpu.CompilerParams(
            dimension_semantics=("parallel", "parallel", "parallel"),
            vmem_limit_bytes=vmem_limit,
        ),
    )(col, w2, b2)

    out = out[:, :M, :C].reshape(B, Ho, Wo, C)                               # trim pads
    return jnp.transpose(out, (0, 3, 1, 2))                                  # back to NCHW


def _reference(x, weight, bias):
    # Same conv on bf16-rounded operands (the kernel's matmul runs on the bf16 MXU
    # path with f32 accumulation), evaluated at highest precision.
    C = weight.shape[0]
    xr = x.astype(jnp.bfloat16).astype(jnp.float32)
    wr = weight.astype(jnp.bfloat16).astype(jnp.float32)
    return jax.lax.conv_general_dilated(
        xr, wr, window_strides=(2, 2), padding=((1, 1), (1, 1)),
        dimension_numbers=("NCHW", "OIHW", "NCHW"),
        precision=jax.lax.Precision.HIGHEST,
    ) + bias.reshape(1, C, 1, 1)


if __name__ == "__main__":
    key = jax.random.PRNGKey(0)

    # Case 1: the canonical small config (B=2, C=4, 16x16).
    B, C, H, W = 2, 4, 16, 16
    kx, kw_, kb, key = jax.random.split(key, 4)
    bound = 1.0 / np.sqrt(C * 9)
    x = jax.random.normal(kx, (B, C, H, W), dtype=jnp.float32)
    weight = jax.random.uniform(kw_, (C, C, 3, 3), jnp.float32, -bound, bound)
    bias = jax.random.uniform(kb, (C,), jnp.float32, -bound, bound)

    out = jax.block_until_ready(downsample(x, weight, bias))
    assert out.shape == (B, C, (H - 1) // 2 + 1, (W - 1) // 2 + 1), out.shape
    np.testing.assert_allclose(np.asarray(out), np.asarray(_reference(x, weight, bias)),
                               rtol=2e-4, atol=2e-4)

    # Case 2: odd spatial extent + non-128 channel count (exercises padding paths).
    B2, C2, H2, W2 = 1, 8, 15, 15
    kx2, kw2, kb2, key = jax.random.split(key, 4)
    bound2 = 1.0 / np.sqrt(C2 * 9)
    x2 = jax.random.normal(kx2, (B2, C2, H2, W2), dtype=jnp.float32)
    weight2 = jax.random.uniform(kw2, (C2, C2, 3, 3), jnp.float32, -bound2, bound2)
    bias2 = jax.random.uniform(kb2, (C2,), jnp.float32, -bound2, bound2)

    out2 = jax.block_until_ready(downsample(x2, weight2, bias2))
    assert out2.shape == (B2, C2, (H2 - 1) // 2 + 1, (W2 - 1) // 2 + 1), out2.shape
    np.testing.assert_allclose(np.asarray(out2), np.asarray(_reference(x2, weight2, bias2)),
                               rtol=2e-4, atol=2e-4)

    print("KERNEL_OK")
</pallas_src>

<mosaic_0001>
module attributes {stable_mosaic.version = 11 : i64} {
  func.func @_downsample_mm_kernel(%arg0: i32, %arg1: i32, %arg2: i32, %arg3: memref<1x64x36xbf16, #tpu.memory_space<vmem>>, %arg4: memref<36x128xbf16, #tpu.memory_space<vmem>>, %arg5: memref<1x128xf32, #tpu.memory_space<vmem>>, %arg6: memref<1x64x128xf32, #tpu.memory_space<vmem>>) attributes {dimension_semantics = [#tpu.dimension_semantics<parallel>, #tpu.dimension_semantics<parallel>, #tpu.dimension_semantics<parallel>], iteration_bounds = array<i64: 2, 1, 1>, scalar_prefetch = 0 : i64, scratch_operands = 0 : i64, tpu.core_type = #tpu.core_type<tc>, window_params = [{transform_indices = @transform_0, window_bounds = array<i64: 1, 64, 36>}, {transform_indices = @transform_1, window_bounds = array<i64: 36, 128>}, {transform_indices = @transform_2, window_bounds = array<i64: 1, 128>}, {transform_indices = @transform_3, window_bounds = array<i64: 1, 64, 128>}]} {
    %c0 = arith.constant 0 : index
    %c0_0 = arith.constant 0 : index
    %c0_1 = arith.constant 0 : index
    %0 = vector.load %arg3[%c0, %c0_0, %c0_1] : memref<1x64x36xbf16, #tpu.memory_space<vmem>>, vector<1x64x36xbf16>
    %1 = vector.shape_cast %0 : vector<1x64x36xbf16> to vector<64x36xbf16>
    %c0_2 = arith.constant 0 : index
    %c0_3 = arith.constant 0 : index
    %2 = vector.load %arg4[%c0_2, %c0_3] : memref<36x128xbf16, #tpu.memory_space<vmem>>, vector<36x128xbf16>
    %cst = arith.constant dense<0.000000e+00> : vector<64x128xf32>
    %3 = tpu.matmul %1, %2, %cst {dimension_numbers = #tpu.dot_dimension_numbers<[1], [0], [0], [1], [0, 0, 1, 1], [], []>} : vector<64x36xbf16>, vector<36x128xbf16>, vector<64x128xf32> -> vector<64x128xf32>
    %c0_4 = arith.constant 0 : index
    %c0_5 = arith.constant 0 : index
    %4 = vector.load %arg5[%c0_4, %c0_5] : memref<1x128xf32, #tpu.memory_space<vmem>>, vector<1x128xf32>
    %5 = vector.broadcast %4 : vector<1x128xf32> to vector<64x128xf32>
    %6 = arith.addf %3, %5 : vector<64x128xf32>
    %7 = vector.shape_cast %6 : vector<64x128xf32> to vector<1x64x128xf32>
    %c0_6 = arith.constant 0 : index
    %c0_7 = arith.constant 0 : index
    %c0_8 = arith.constant 0 : index
    %8 = vector.load %arg6[%c0_6, %c0_7, %c0_8] : memref<1x64x128xf32, #tpu.memory_space<vmem>>, vector<1x64x128xf32>
    tpu.vector_store %arg6[%c0_6, %c0_7, %c0_8], %7 {strides = array<i32>} : memref<1x64x128xf32, #tpu.memory_space<vmem>>, vector<1x64x128xf32>,
    return
  }
  func.func @transform_0(%arg0: i32, %arg1: i32, %arg2: i32) -> (i32, i32, i32) {
    %c0_i32 = arith.constant 0 : i32
    %c0_i32_0 = arith.constant 0 : i32
    return %arg0, %arg2, %c0_i32 : i32, i32, i32
  }
  func.func @transform_1(%arg0: i32, %arg1: i32, %arg2: i32) -> (i32, i32) {
    %c0_i32 = arith.constant 0 : i32
    %c0_i32_0 = arith.constant 0 : i32
    return %c0_i32, %arg1 : i32, i32
  }
  func.func @transform_2(%arg0: i32, %arg1: i32, %arg2: i32) -> (i32, i32) {
    %c0_i32 = arith.constant 0 : i32
    %c0_i32_0 = arith.constant 0 : i32
    return %c0_i32, %arg1 : i32, i32
  }
  func.func @transform_3(%arg0: i32, %arg1: i32, %arg2: i32) -> (i32, i32, i32) {
    %c0_i32 = arith.constant 0 : i32
    return %arg0, %arg2, %arg1 : i32, i32, i32
  }
}

</mosaic_0001>

<llo_original>
// kernel: tpu_custom_call.1
$region0: #{tpu_custom_call.1}
  #allocation0 [shape = 'u32[]', space=smem, size = 0x4, offset = 0x4, fixed_abs, tag = 'smem constant byte address 0x4 - core index']
  #allocation1 [shape = 'u32[144,128]{1,0:T(1,128)}', space=vmem, size = 0x12000, scoped, tag = 'internal scratch']
  %s0 = inlined_call_operand.vmem [shape: bf16[2,64,36], index: 0, kind: input, shape index: {}]
  %s1 = inlined_call_operand.vmem [shape: bf16[36,128], index: 1, kind: input, shape index: {}]
  %s2 = inlined_call_operand.vmem [shape: f32[1,128], index: 2, kind: input, shape index: {}]
  %s3 = inlined_call_operand.hbm [shape: f32[2,64,128], index: 3, kind: output, shape index: {}]
  %s4 = sld [smem:[#allocation0]]
  $region45: #{tpu_custom_call.1} parent=0
    _
  %s6 = ssub.s32 1, %s4
  %s7 = scalar_select 0, %s6, %s4
  $region1: #{tpu_custom_call.1} parent=0
    #allocation2 [shape = 'u8[65536]{0}', space=vmem, size = 0x10000, scoped, tag = 'output window, operand 0']
    #allocation3 [shape = 's32[2]{0}', space=sflag, size = 0x8, scoped, tag = 'scoped memory for tpu_custom_call.1']
    %8 = vsyncpa [#allocation3], 0
    %s9 = scalar_lea.sflag [#allocation3], 1
    %10 = vsyncpa %s9, 0
    loop: start=0, step=1, limit=4
    $region2: #{tpu_custom_call.1} parent=1 // loop_pre_header
      _
    $region3: #{tpu_custom_call.1} parent=1 // loop_header
      %s12 = sphi 0, %s16
      %p13 = scmp.ge.s32.totalorder %s12, 4
      %s19 = sphi 0, %s38
      %s20 = sphi 0, %s34
      %s21 = sphi 0, %s30
      %s22 = sphi 0, %s19
      %s23 = sphi 0, %s20
      %s24 = sphi 0, %s21
      %s25 = sphi 0, %s22
      %s26 = sphi 0, %s23
      %s27 = sphi 0, %s24
      %s43 = sphi 0, %s45
      %s46 = sphi 0, %s43
      %s47 = sphi 0, %s46
      %s63 = sphi 0, %s47
      %s69 = sphi 0, %s71
      %s72 = sphi 0, %s69
      %s73 = sphi 0, %s72
      %s89 = sphi 0, %s73
      %s95 = sphi 0, %s97
      %s98 = sphi 0, %s95
      %s99 = sphi 0, %s98
      %s115 = sphi 0, %s99
      %s125 = sphi 0, %s127
      %s128 = sphi 0, %s125
      %s129 = sphi 0, %s128
      %s145 = sphi 0, %s129
    $region4: #{tpu_custom_call.1} parent=1 // loop_header_branch
      %15 = sbr.rel (%p13) target = $region8
    $region5: #{tpu_custom_call.1} parent=1 // loop_body
      %s17 = ssub.s32 %s12, 1
      %s18 = ssub.s32 %s12, 2
      %s28 = sadd.s32 1, %s21
      %p29 = scmp.ge.s32.totalorder %s28, 1
      %s30 = scalar_select %p29, 0, %s28
      %s31 = sadd.s32 1, %s20
      %s32 = scalar_select %p29, %s31, %s20
      %p33 = scmp.ge.s32.totalorder %s32, 1
      %s34 = scalar_select %p33, 0, %s32
      %s35 = sadd.s32 1, %s19
      %s36 = scalar_select %p33, %s35, %s19
      %p37 = scmp.ge.s32.totalorder %s36, 2
      %s38 = scalar_select %p37, 0, %s36
      %s39 = ssub.s32 %s19, %s38
      %s40 = ssub.s32 %s21, %s30
      %s41 = sor.u32 %s39, %s40
      %p42 = scmp.eq.s32.totalorder %s41, 0
      %s44 = sadd.s32 %s43, 1
      %s45 = scalar_select %p42, %s43, %s44
      %p48 = pneg %p42
      %p49 = scmp.eq.s32.totalorder %s12, 1
      %p50 = por %p48, %p49
      %p51 = scmp.ne.s32.totalorder %s43, %s46
      %p52 = scmp.eq.s32.totalorder %s12, 0
      %p53 = por %p51, %p52
      %p54 = scmp.ne.s32.totalorder %s43, %s46
      %p55 = scmp.eq.s32.totalorder %s17, 1
      %p56 = por %p54, %p55
      %p57 = scmp.ne.s32.totalorder %s46, %s47
      %p58 = scmp.eq.s32.totalorder %s17, 0
      %p59 = por %p57, %p58
      %p60 = scmp.ne.s32.totalorder %s46, %s47
      %p61 = scmp.eq.s32.totalorder %s18, 1
      %p62 = por %p60, %p61
      %p64 = scmp.ne.s32.totalorder %s47, %s63
      %p65 = scmp.eq.s32.totalorder %s18, 0
      %p66 = por %p64, %p65
      %s67 = ssub.s32 %s20, %s34
      %p68 = scmp.eq.s32.totalorder %s67, 0
      %s70 = sadd.s32 %s69, 1
      %s71 = scalar_select %p68, %s69, %s70
      %p74 = pneg %p68
      %p75 = scmp.eq.s32.totalorder %s12, 1
      %p76 = por %p74, %p75
      %p77 = scmp.ne.s32.totalorder %s69, %s72
      %p78 = scmp.eq.s32.totalorder %s12, 0
      %p79 = por %p77, %p78
      %p80 = scmp.ne.s32.totalorder %s69, %s72
      %p81 = scmp.eq.s32.totalorder %s17, 1
      %p82 = por %p80, %p81
      %p83 = scmp.ne.s32.totalorder %s72, %s73
      %p84 = scmp.eq.s32.totalorder %s17, 0
      %p85 = por %p83, %p84
      %p86 = scmp.ne.s32.totalorder %s72, %s73
      %p87 = scmp.eq.s32.totalorder %s18, 1
      %p88 = por %p86, %p87
      %p90 = scmp.ne.s32.totalorder %s73, %s89
      %p91 = scmp.eq.s32.totalorder %s18, 0
      %p92 = por %p90, %p91
      %s93 = ssub.s32 %s20, %s34
      %p94 = scmp.eq.s32.totalorder %s93, 0
      %s96 = sadd.s32 %s95, 1
      %s97 = scalar_select %p94, %s95, %s96
      %p100 = pneg %p94
      %p101 = scmp.eq.s32.totalorder %s12, 1
      %p102 = por %p100, %p101
      %p103 = scmp.ne.s32.totalorder %s95, %s98
      %p104 = scmp.eq.s32.totalorder %s12, 0
      %p105 = por %p103, %p104
      %p106 = scmp.ne.s32.totalorder %s95, %s98
      %p107 = scmp.eq.s32.totalorder %s17, 1
      %p108 = por %p106, %p107
      %p109 = scmp.ne.s32.totalorder %s98, %s99
      %p110 = scmp.eq.s32.totalorder %s17, 0
      %p111 = por %p109, %p110
      %p112 = scmp.ne.s32.totalorder %s98, %s99
      %p113 = scmp.eq.s32.totalorder %s18, 1
      %p114 = por %p112, %p113
      %p116 = scmp.ne.s32.totalorder %s99, %s115
      %p117 = scmp.eq.s32.totalorder %s18, 0
      %p118 = por %p116, %p117
      %s119 = ssub.s32 %s19, %s38
      %s120 = ssub.s32 %s21, %s30
      %s121 = sor.u32 %s119, %s120
      %s122 = ssub.s32 %s20, %s34
      %s123 = sor.u32 %s121, %s122
      %p124 = scmp.eq.s32.totalorder %s123, 0
      %s126 = sadd.s32 %s125, 1
      %s127 = scalar_select %p124, %s125, %s126
      %p130 = pneg %p124
      %p131 = scmp.eq.s32.totalorder %s12, 1
      %p132 = por %p130, %p131
      %p133 = scmp.ne.s32.totalorder %s125, %s128
      %p134 = scmp.eq.s32.totalorder %s12, 0
      %p135 = por %p133, %p134
      %p136 = scmp.ne.s32.totalorder %s125, %s128
      %p137 = scmp.eq.s32.totalorder %s17, 1
      %p138 = por %p136, %p137
      %p139 = scmp.ne.s32.totalorder %s128, %s129
      %p140 = scmp.eq.s32.totalorder %s17, 0
      %p141 = por %p139, %p140
      %p142 = scmp.ne.s32.totalorder %s128, %s129
      %p143 = scmp.eq.s32.totalorder %s18, 1
      %p144 = por %p142, %p143
      %p146 = scmp.ne.s32.totalorder %s129, %s145
      %p147 = scmp.eq.s32.totalorder %s18, 0
      %p148 = por %p146, %p147
      %p149 = scmp.le.s32.totalorder 1, %s12
      %p150 = scmp.lt.s32.totalorder %s12, 3
      %p151 = pnand %p149, %p150
      %p152 = pneg %p151
      // Predicated region
      $region9: #{tpu_custom_call.1} parent=5 // pred_check
        _
      $region10: #{tpu_custom_call.1} parent=5 // pred_check_branch
        %154 = sbr.rel (%p151) target = $region12
      $region11: #{tpu_custom_call.1} parent=5 // pred_region
        %s155 = ssub.s32 %s12, 1
        // Predicated region
        $region13: #{tpu_custom_call.1} parent=11 // pred_check
          %p156 = pneg %p85
        $region14: #{tpu_custom_call.1} parent=11 // pred_check_branch
          %158 = sbr.rel (%p156) target = $region16
        $region15: #{tpu_custom_call.1} parent=11 // pred_region
          %p159 = scmp.lt.s32.totalorder %s23, 0
          %s160 = scalar_select %p159, %s23, 0
          %s161 = smul.addr %s160, 4
          %s162 = scalar_lea.vmem %s1, %s161
        $region16: #{tpu_custom_call.1} parent=11 // pred_fallthru
          _
        // Predicated region
        $region17: #{tpu_custom_call.1} parent=11 // pred_check
          %p163 = pneg %p111
        $region18: #{tpu_custom_call.1} parent=11 // pred_check_branch
          %165 = sbr.rel (%p163) target = $region20
        $region19: #{tpu_custom_call.1} parent=11 // pred_region
          %p166 = scmp.lt.s32.totalorder %s23, 0
          %s167 = scalar_select %p166, %s23, 0
          %s168 = scalar_lea.vmem %s2, %s167
        $region20: #{tpu_custom_call.1} parent=11 // pred_fallthru
          _
      $region12: #{tpu_custom_call.1} parent=5 // pred_fallthru
        _
      %p169 = scmp.lt.s32.totalorder %s12, 2
      // Predicated region
      $region21: #{tpu_custom_call.1} parent=5 // pred_check
        %p170 = pneg %p169
      $region22: #{tpu_custom_call.1} parent=5 // pred_check_branch
        %172 = sbr.rel (%p170) target = $region24
      $region23: #{tpu_custom_call.1} parent=5 // pred_region
        // Predicated region
        $region25: #{tpu_custom_call.1} parent=23 // pred_check
          %p173 = pneg %p53
        $region26: #{tpu_custom_call.1} parent=23 // pred_check_branch
          %175 = sbr.rel (%p173) target = $region28
        $region27: #{tpu_custom_call.1} parent=23 // pred_region
          %s176 = smul.u32 8, %s21
          %p177 = scmp.lt.s32.totalorder %s19, 1
          %s178 = scalar_select %p177, %s19, 1
          %p179 = scmp.lt.s32.totalorder %s176, 7
          %s180 = scalar_select %p179, %s176, 7
          %s181 = smul.addr %s178, 8
          %s182 = sadd.s32 %s180, %s181
          %s183 = smul.addr %s182, 4
          %s184 = scalar_lea.vmem %s0, %s183
          %s185 = smul.u32 8, %s21
        $region28: #{tpu_custom_call.1} parent=23 // pred_fallthru
          _
      $region24: #{tpu_custom_call.1} parent=5 // pred_fallthru
        _
      %p186 = scmp.le.s32.totalorder 1, %s12
      %p187 = scmp.lt.s32.totalorder %s12, 3
      %p188 = pnand %p186, %p187
      %p189 = pneg %p188
      // Predicated region
      $region29: #{tpu_custom_call.1} parent=5 // pred_check
        _
      $region30: #{tpu_custom_call.1} parent=5 // pred_check_branch
        %191 = sbr.rel (%p188) target = $region32
      $region31: #{tpu_custom_call.1} parent=5 // pred_region
        %s192 = ssub.s32 %s12, 1
        %s193 = smul.u32 8, %s24
        %p194 = scmp.lt.s32.totalorder %s22, 1
        %s195 = scalar_select %p194, %s22, 1
        %p196 = scmp.lt.s32.totalorder %s193, 7
        %s197 = scalar_select %p196, %s193, 7
        %s198 = smul.addr %s195, 8
        %s199 = sadd.s32 %s197, %s198
        %s200 = smul.addr %s199, 4
        %s201 = scalar_lea.vmem %s0, %s200
        %p202 = pneg %p59
        %p203 = pneg %p56
        %p204 = scmp.lt.s32.totalorder %s23, 0
        %s205 = scalar_select %p204, %s23, 0
        %s206 = smul.addr %s205, 4
        %s207 = scalar_lea.vmem %s1, %s206
        %p208 = pneg %p85
        %p209 = pneg %p82
        %p210 = scmp.lt.s32.totalorder %s23, 0
        %s211 = scalar_select %p210, %s23, 0
        %s212 = scalar_lea.vmem %s2, %s211
        %p213 = pneg %p111
        %p214 = pneg %p108
        %p215 = pneg %p141
        %p216 = pneg %p138
        %s217 = sand.u32 %s128, 1
        %s218 = scalar_lea.sflag [#allocation3], %s217
        %s219 = sand.u32 %s128, 1
        %s220 = smul.addr %s219, 64
        %s221 = scalar_lea.vmem [#allocation2], %s220
        %s222 = smul.u32 8, %s24
        %p223 = scmp.lt.s32.totalorder %s22, 1
        %s224 = scalar_select %p223, %s22, 1
        %p225 = scmp.lt.s32.totalorder %s222, 7
        %s226 = scalar_select %p225, %s222, 7
        %s227 = smul.addr %s224, 8
        %s228 = sadd.s32 %s226, %s227
        %s229 = smul.addr %s228, 4
        %s230 = scalar_lea.vmem %s0, %s229
        %s231 = smul.u32 8, %s24
        %p232 = scmp.lt.s32.totalorder %s23, 0
        %s233 = scalar_select %p232, %s23, 0
        %s234 = smul.addr %s233, 4
        %s235 = scalar_lea.vmem %s1, %s234
        %p236 = scmp.lt.s32.totalorder %s23, 0
        %s237 = scalar_select %p236, %s23, 0
        %s238 = scalar_lea.vmem %s2, %s237
        %s239 = smul.u32 8, %s24
        %v241 = vld [vmem:[%s230] sm:$0xf]
        %v242 = vld [vmem:[%s230 + $0x4] sm:$0xf]
        %v243 = vld [vmem:[%s230 + $0x8] sm:$0xf]
        %v244 = vld [vmem:[%s230 + $0xc] sm:$0xf]
        %v245 = vld [vmem:[%s230 + $0x10] sm:$0xf]
        %v246 = vld [vmem:[%s230 + $0x14] sm:$0xf]
        %v247 = vld [vmem:[%s230 + $0x18] sm:$0xf]
        %v248 = vld [vmem:[%s230 + $0x1c] sm:$0xf]
        %v249 = vld [vmem:[%s235] sm:$0xf]
        %v250 = vld [vmem:[%s235 + $0x4] sm:$0xf]
        %v251 = vld [vmem:[%s235 + $0x8] sm:$0xf]
        %v252 = vld [vmem:[%s235 + $0xc] sm:$0xf]
        %v253 = vld [vmem:[%s235 + $0x10] sm:$0x3]
        %v254 = vld [vmem:[%s238] sm:$0x1]
        %v256 = vlaneseq
        %v257 = vshrl.u32 %v256, 7
        %v258 = vsub.s32 0, %v257
        %v259 = vrot.slane %v254, %v258
        %v269 = vunpack.c.l.b16 %v241
        %v270 = vunpack.c.l.b16 %v242
        %v271 = vunpack.c.l.b16 %v243
        %v272 = vunpack.c.l.b16 %v244
        %v273 = vunpack.c.l.b16 %v245
        %v274 = vunpack.c.l.b16 %v246
        %v275 = vunpack.c.l.b16 %v247
        %v276 = vunpack.c.l.b16 %v248
        %v277 = vpack.c.b16 %v270, %v269
        %v278 = vpack.c.b16 %v272, %v271
        %v279 = vpack.c.b16 %v274, %v273
        %v280 = vpack.c.b16 %v276, %v275
        %v286 = vunpack.c.l.b16 %v249
        %v287 = vunpack.c.l.b16 %v250
        %v288 = vunpack.c.l.b16 %v251
        %v289 = vunpack.c.l.b16 %v252
        %v290 = vunpack.c.l.b16 %v253
        %v291 = vpack.c.b16 %v287, %v286
        %v292 = vpack.c.b16 %v289, %v288
        %v293 = vpack.c.b16 %v290, %v290
        %vm296 = vcmask 293888
        %v298 = vsel %vm296, %v277, 0
        %v301 = vsel %vm296, %v278, 0
        %v304 = vsel %vm296, %v279, 0
        %v307 = vsel %vm296, %v280, 0
        %vm309 = vcmask 1041408
        %v311 = vsel %vm309, %v293, 0
        %313 = vmatprep.subr.bf16.mxu0 0
        %314 = vmatpush1.bf16.msra.mxu0 %v291
        %315 = vmatprep.subr.bf16.mxu0 0
        %316 = vmatpush1.bf16.msra.mxu0 %v292
        %317 = vmatprep.subr.bf16.mxu0 0
        %318 = vmatpush1.bf16.msra.mxu0 %v311
        %319 = vmatprep.subr.bf16.mxu0 0
        %320 = vmatpush1.bf16.msra.mxu0 0
        %321 = vmatprep.subr.bf16.mxu0 0
        %322 = vmatpush1.bf16.msra.mxu0 0
        %323 = vmatprep.subr.bf16.mxu0 0
        %324 = vmatpush1.bf16.msra.mxu0 0
        %325 = vmatprep.subr.bf16.mxu0 0
        %326 = vmatpush1.bf16.msra.mxu0 0
        %327 = vmatprep.subr.bf16.mxu0 0
        %328 = vmatpush1.bf16.msra.mxu0 0
        %329 = vmatprep.subr.bf16.mxu0 0
        %330 = vmatpush1.bf16.msra.mxu0 0
        %331 = vmatprep.subr.bf16.mxu0 0
        %332 = vmatpush1.bf16.msra.mxu0 0
        %333 = vmatprep.subr.bf16.mxu0 0
        %334 = vmatpush1.bf16.msra.mxu0 0
        %335 = vmatprep.subr.bf16.mxu0 0
        %336 = vmatpush1.bf16.msra.mxu0 0
        %337 = vmatprep.subr.bf16.mxu0 0
        %338 = vmatpush1.bf16.msra.mxu0 0
        %339 = vmatprep.subr.bf16.mxu0 0
        %340 = vmatpush1.bf16.msra.mxu0 0
        %341 = vmatprep.subr.bf16.mxu0 0
        %342 = vmatpush1.bf16.msra.mxu0 0
        %343 = vmatprep.subr.bf16.mxu0 0
        %344 = vmatpush1.bf16.msra.mxu0 0
        %345 = vmatprep.mubr.bf16.mxu0 0
        %346 = vmatmul.mubr.bf16.gmra.mrb[0].mxu0 %v298
        %v347 = vpop.f32.mrb[0].mxu0
        %v348 = vadd.f32 %v259, %v347
        %v349 = vpop.f32.mrb[0].mxu0
        %v350 = vpop.f32.mrb[0].mxu0
        %v351 = vadd.f32 %v259, %v350
        %v352 = vpop.f32.mrb[0].mxu0
        %353 = vmatprep.mubr.bf16.mxu0 0
        %354 = vmatmul.mubr.bf16.gmra.mrb[0].mxu0 %v301
        %v355 = vpop.f32.mrb[0].mxu0
        %v356 = vadd.f32 %v259, %v355
        %v357 = vpop.f32.mrb[0].mxu0
        %v358 = vpop.f32.mrb[0].mxu0
        %v359 = vadd.f32 %v259, %v358
        %v360 = vpop.f32.mrb[0].mxu0
        %361 = vmatprep.mubr.bf16.mxu0 0
        %362 = vmatmul.mubr.bf16.gmra.mrb[0].mxu0 %v304
        %v363 = vpop.f32.mrb[0].mxu0
        %v364 = vadd.f32 %v259, %v363
        %v365 = vpop.f32.mrb[0].mxu0
        %v366 = vpop.f32.mrb[0].mxu0
        %v367 = vadd.f32 %v259, %v366
        %v368 = vpop.f32.mrb[0].mxu0
        %369 = vmatprep.mubr.bf16.mxu0 0
        %370 = vmatmul.mubr.bf16.gmra.mrb[0].mxu0 %v307
        %v371 = vpop.f32.mrb[0].mxu0
        %v372 = vadd.f32 %v259, %v371
        %v373 = vpop.f32.mrb[0].mxu0
        %v374 = vpop.f32.mrb[0].mxu0
        %v375 = vadd.f32 %v259, %v374
        %v376 = vpop.f32.mrb[0].mxu0
        %377 = vdwg.mxu0
        %378 = vst [vmem:[%s221] sm:$0xff] %v348
        %379 = vst [vmem:[%s221 + $0x8] sm:$0xff] %v351
        %380 = vst [vmem:[%s221 + $0x10] sm:$0xff] %v356
        %381 = vst [vmem:[%s221 + $0x18] sm:$0xff] %v359
        %382 = vst [vmem:[%s221 + $0x20] sm:$0xff] %v364
        %383 = vst [vmem:[%s221 + $0x28] sm:$0xff] %v367
        %384 = vst [vmem:[%s221 + $0x30] sm:$0xff] %v372
        %385 = vst [vmem:[%s221 + $0x38] sm:$0xff] %v375
        %s386 = sand.u32 %s128, 1
        %s387 = scalar_lea.sflag [#allocation3], %s386
        %s388 = sand.u32 %s128, 1
        %s389 = smul.addr %s388, 64
        %s390 = scalar_lea.vmem [#allocation2], %s389
        // Predicated region
        $region33: #{tpu_custom_call.1} parent=31 // pred_check
          %p391 = pneg %p138
        $region34: #{tpu_custom_call.1} parent=31 // pred_check_branch
          %393 = sbr.rel (%p391) target = $region36
        $region35: #{tpu_custom_call.1} parent=31 // pred_region
          %s394 = smul.u32 8, %s24
          %s396 = ssub.s32 1024, 1024
          %397 = vsyncadd %s387, %s396
          %s398 = sadd.s32 %s23, %s394
          %s399 = smul.addr %s22, 8
          %s400 = sadd.s32 %s398, %s399
          %s401 = smul.addr %s400, 128
          %s402 = scalar_lea.hbm %s3, %s401
          %s403 = sshll.u32 %s390, 4
          %s404 = int_to_ptr.vmem [resolvable:$true] %s403
          %409 = dma.vmem_to_hbm [thread:$0]  %s404, 1024, %s402, %s387, 128, 128, 8
        $region36: #{tpu_custom_call.1} parent=31 // pred_fallthru
          _
      $region32: #{tpu_custom_call.1} parent=5 // pred_fallthru
        _
      %p410 = scmp.le.s32.totalorder 2, %s12
      // Predicated region
      $region37: #{tpu_custom_call.1} parent=5 // pred_check
        %p411 = pneg %p410
      $region38: #{tpu_custom_call.1} parent=5 // pred_check_branch
        %413 = sbr.rel (%p411) target = $region40
      $region39: #{tpu_custom_call.1} parent=5 // pred_region
        %s414 = ssub.s32 %s12, 2
        // Predicated region
        $region41: #{tpu_custom_call.1} parent=39 // pred_check
          %p415 = pneg %p144
        $region42: #{tpu_custom_call.1} parent=39 // pred_check_branch
          %417 = sbr.rel (%p415) target = $region44
        $region43: #{tpu_custom_call.1} parent=39 // pred_region
          %s418 = sand.u32 %s129, 1
          %s419 = scalar_lea.sflag [#allocation3], %s418
          %s420 = sand.u32 %s129, 1
          %s421 = smul.addr %s420, 64
          %s422 = scalar_lea.vmem [#allocation2], %s421
          %423 = dma.done %s419, 1024
        $region44: #{tpu_custom_call.1} parent=39 // pred_fallthru
          _
      $region40: #{tpu_custom_call.1} parent=5 // pred_fallthru
        _
    $region6: #{tpu_custom_call.1} parent=1 // loop_footer
      %s16 = sadd.s32 1, %s12
    $region7: #{tpu_custom_call.1} parent=1 // loop_footer_branch
      %11 = sbr.rel target = $region3
    $region8: #{tpu_custom_call.1} parent=1 // loop_exit
      _
    %424 = vsyncpa [#allocation3], 1
    %s425 = scalar_lea.sflag [#allocation3], 1
    %426 = vsyncpa %s425, 1

</llo_original>
